<compile_context>
chip_gen: v7x
topology: tpu7x:2x2x1
jax: 0.10.0
libtpu: 0.0.40
codegen_flags: <defaults>
</compile_context>

<pallas_src>
import jax
import jax.numpy as jnp
import numpy as np
from jax.experimental import pallas as pl
from jax.experimental.pallas import tpu as pltpu

SEQ_LENGTH = 4
INPUT_SIZE = SEQ_LENGTH            # 4
HIDDEN_SIZE = 2 * SEQ_LENGTH       # 8
CELL_SIZE = 2
OUTPUT_SIZE = 1
BATCH = 8                          # fill all 8 f32 sublanes of a vreg

LANE = 128
PACK = OUTPUT_SIZE + 2 * CELL_SIZE     # out | h_new | c_new  = 5 lanes


def lstm_kernel(x_ref, h_ref, c_ref, wgx_ref, wgh_ref, bg_ref,
                wo_ref, bo_ref, slab_ref):
    x = x_ref[...]          # (B, in)
    h = h_ref[...]          # (B, hid)
    c = c_ref[...]          # (B, cell)
    wgx = wgx_ref[...]      # (cell, in)
    wgh = wgh_ref[...]      # (cell, hid)
    bg = bg_ref[...]        # (1, cell)
    wo = wo_ref[...]        # (1, cell)
    bo = bo_ref[...]        # (1, 1)

    B = x.shape[0]

    # Gate linear: one lane-reduction per output column (VPU mul + XLU reduce,
    # no MXU).  g = x @ Wg_x^T + h @ Wg_h^T + bg     -> (B, cell)
    cols = []
    for ci in range(CELL_SIZE):      # CELL_SIZE == 2, fully unrolled at trace
        gx = jnp.sum(x * wgx[ci:ci + 1, :], axis=-1, keepdims=True)   # (B, 1)
        gh = jnp.sum(h * wgh[ci:ci + 1, :], axis=-1, keepdims=True)   # (B, 1)
        cols.append(gx + gh)
    g = jnp.concatenate(cols, axis=1) + bg                            # (B, cell)

    gate_sig = jax.nn.sigmoid(g)        # f == i == o (shared gate), EUP
    cell_sub = jnp.tanh(g)              # EUP
    c_new = (c + cell_sub) * gate_sig   # == c*f + cell_sub*i  since f == i
    h_new = jnp.tanh(c_new) * gate_sig

    # Output head: (B, cell) -> (B, 1), again VPU + lane reduce.
    out = jax.nn.sigmoid(
        jnp.sum(h_new * wo, axis=-1, keepdims=True) + bo)             # (B, 1)

    # One lane-dense (B, 128) full-tile store instead of three masked
    # sub-128-lane stores.
    slab_ref[...] = jnp.concatenate(
        [out, h_new, c_new, jnp.zeros((B, LANE - PACK), jnp.float32)], axis=1)


@jax.jit
def lstm_forward(x, hidden, cell, wg, bg, wo, bo):
    """x:(B,in) hidden:(B,hid) cell:(B,cell); wg:(cell,in+hid) wo:(1,cell)."""
    B = x.shape[0]
    # Split the gate weight instead of concatenating (x, hidden) in the
    # wrapper: removes an XLA concat + an extra HBM buffer/input DMA.
    wgx = wg[:, :INPUT_SIZE]           # (cell, in)
    wgh = wg[:, INPUT_SIZE:]           # (cell, hid)
    bg2 = bg.reshape(1, -1)            # (1, cell)
    bo2 = bo.reshape(1, -1)            # (1, 1)

    vmem = pl.BlockSpec(memory_space=pltpu.MemorySpace.VMEM)
    slab = pl.pallas_call(
        lstm_kernel,
        out_shape=jax.ShapeDtypeStruct((B, LANE), jnp.float32),
        in_specs=[vmem] * 8,
        out_specs=vmem,
    )(x, hidden, cell, wgx, wgh, bg2, wo, bo2)

    out = slab[:, 0:OUTPUT_SIZE]
    h_new = slab[:, OUTPUT_SIZE:OUTPUT_SIZE + CELL_SIZE]
    c_new = slab[:, OUTPUT_SIZE + CELL_SIZE:OUTPUT_SIZE + 2 * CELL_SIZE]
    return out, h_new, c_new


def reference_forward(x, hidden, cell, wg, bg, wo, bo):
    combined = jnp.concatenate([x, hidden], axis=1)
    g = combined @ wg.T + bg
    s = jax.nn.sigmoid(g)
    cs = jnp.tanh(g)
    c_new = cell * s + cs * s
    h_new = jnp.tanh(c_new) * s
    out = jax.nn.sigmoid(h_new @ wo.T + bo)
    return out, h_new, c_new


if __name__ == "__main__":
    key = jax.random.PRNGKey(0)
    k1, k2, k3, k4, k5, k6 = jax.random.split(key, 6)

    # Deterministic parameter init (uniform, like nn.Linear's bounded init).
    fan_g = INPUT_SIZE + HIDDEN_SIZE
    wg = jax.random.uniform(k1, (CELL_SIZE, fan_g), jnp.float32,
                            -1.0 / np.sqrt(fan_g), 1.0 / np.sqrt(fan_g))
    bg = jax.random.uniform(k2, (CELL_SIZE,), jnp.float32,
                            -1.0 / np.sqrt(fan_g), 1.0 / np.sqrt(fan_g))
    wo = jax.random.uniform(k3, (OUTPUT_SIZE, CELL_SIZE), jnp.float32,
                            -1.0 / np.sqrt(CELL_SIZE), 1.0 / np.sqrt(CELL_SIZE))
    bo = jax.random.uniform(k4, (OUTPUT_SIZE,), jnp.float32,
                            -1.0 / np.sqrt(CELL_SIZE), 1.0 / np.sqrt(CELL_SIZE))

    x = jax.random.normal(k5, (BATCH, INPUT_SIZE), jnp.float32)
    hidden0 = jnp.zeros((BATCH, HIDDEN_SIZE), jnp.float32)   # initHidden
    cell0 = jax.random.normal(k6, (BATCH, CELL_SIZE), jnp.float32)

    out, h_new, c_new = lstm_forward(x, hidden0, cell0, wg, bg, wo, bo)
    jax.block_until_ready((out, h_new, c_new))

    ref_out, ref_h, ref_c = reference_forward(x, hidden0, cell0, wg, bg, wo, bo)
    assert np.allclose(np.asarray(out), np.asarray(ref_out), atol=1e-5)
    assert np.allclose(np.asarray(h_new), np.asarray(ref_h), atol=1e-5)
    assert np.allclose(np.asarray(c_new), np.asarray(ref_c), atol=1e-5)

    # NOTE: nn.LogSoftmax is declared in __init__ but never used in forward().
    print("KERNEL_OK")
</pallas_src>

<mosaic_0001>
module attributes {stable_mosaic.version = 11 : i64} {
  func.func @lstm_kernel(%arg0: memref<8x4xf32, #tpu.memory_space<vmem>>, %arg1: memref<8x8xf32, #tpu.memory_space<vmem>>, %arg2: memref<8x2xf32, #tpu.memory_space<vmem>>, %arg3: memref<2x4xf32, #tpu.memory_space<vmem>>, %arg4: memref<2x8xf32, #tpu.memory_space<vmem>>, %arg5: memref<1x2xf32, #tpu.memory_space<vmem>>, %arg6: memref<1x2xf32, #tpu.memory_space<vmem>>, %arg7: memref<1x1xf32, #tpu.memory_space<vmem>>, %arg8: memref<8x128xf32, #tpu.memory_space<vmem>>) attributes {dimension_semantics = [], scalar_prefetch = 0 : i64, scratch_operands = 0 : i64, tpu.core_type = #tpu.core_type<tc>} {
    %c0 = arith.constant 0 : index
    %c0_0 = arith.constant 0 : index
    %0 = vector.load %arg0[%c0, %c0_0] : memref<8x4xf32, #tpu.memory_space<vmem>>, vector<8x4xf32>
    %c0_1 = arith.constant 0 : index
    %c0_2 = arith.constant 0 : index
    %1 = vector.load %arg1[%c0_1, %c0_2] : memref<8x8xf32, #tpu.memory_space<vmem>>, vector<8x8xf32>
    %c0_3 = arith.constant 0 : index
    %c0_4 = arith.constant 0 : index
    %2 = vector.load %arg2[%c0_3, %c0_4] : memref<8x2xf32, #tpu.memory_space<vmem>>, vector<8x2xf32>
    %c0_5 = arith.constant 0 : index
    %c0_6 = arith.constant 0 : index
    %3 = vector.load %arg3[%c0_5, %c0_6] : memref<2x4xf32, #tpu.memory_space<vmem>>, vector<2x4xf32>
    %c0_7 = arith.constant 0 : index
    %c0_8 = arith.constant 0 : index
    %4 = vector.load %arg4[%c0_7, %c0_8] : memref<2x8xf32, #tpu.memory_space<vmem>>, vector<2x8xf32>
    %c0_9 = arith.constant 0 : index
    %c0_10 = arith.constant 0 : index
    %5 = vector.load %arg5[%c0_9, %c0_10] : memref<1x2xf32, #tpu.memory_space<vmem>>, vector<1x2xf32>
    %c0_11 = arith.constant 0 : index
    %c0_12 = arith.constant 0 : index
    %6 = vector.load %arg6[%c0_11, %c0_12] : memref<1x2xf32, #tpu.memory_space<vmem>>, vector<1x2xf32>
    %c0_13 = arith.constant 0 : index
    %c0_14 = arith.constant 0 : index
    %7 = vector.load %arg7[%c0_13, %c0_14] : memref<1x1xf32, #tpu.memory_space<vmem>>, vector<1x1xf32>
    %8 = vector.extract_strided_slice %3 {offsets = [0, 0], sizes = [1, 4], strides = [1, 1]} : vector<2x4xf32> to vector<1x4xf32>
    %9 = vector.broadcast %8 : vector<1x4xf32> to vector<8x4xf32>
    %10 = arith.mulf %0, %9 : vector<8x4xf32>
    %cst = arith.constant dense<0.000000e+00> : vector<8xf32>
    %11 = vector.multi_reduction <add>, %10, %cst [1] : vector<8x4xf32> to vector<8xf32>
    %12 = vector.shape_cast %11 : vector<8xf32> to vector<8x1xf32>
    %13 = vector.extract_strided_slice %4 {offsets = [0, 0], sizes = [1, 8], strides = [1, 1]} : vector<2x8xf32> to vector<1x8xf32>
    %14 = vector.broadcast %13 : vector<1x8xf32> to vector<8x8xf32>
    %15 = arith.mulf %1, %14 : vector<8x8xf32>
    %cst_15 = arith.constant dense<0.000000e+00> : vector<8xf32>
    %16 = vector.multi_reduction <add>, %15, %cst_15 [1] : vector<8x8xf32> to vector<8xf32>
    %17 = vector.shape_cast %16 : vector<8xf32> to vector<8x1xf32>
    %18 = arith.addf %12, %17 : vector<8x1xf32>
    %19 = vector.extract_strided_slice %3 {offsets = [1, 0], sizes = [1, 4], strides = [1, 1]} : vector<2x4xf32> to vector<1x4xf32>
    %20 = vector.broadcast %19 : vector<1x4xf32> to vector<8x4xf32>
    %21 = arith.mulf %0, %20 : vector<8x4xf32>
    %cst_16 = arith.constant dense<0.000000e+00> : vector<8xf32>
    %22 = vector.multi_reduction <add>, %21, %cst_16 [1] : vector<8x4xf32> to vector<8xf32>
    %23 = vector.shape_cast %22 : vector<8xf32> to vector<8x1xf32>
    %24 = vector.extract_strided_slice %4 {offsets = [1, 0], sizes = [1, 8], strides = [1, 1]} : vector<2x8xf32> to vector<1x8xf32>
    %25 = vector.broadcast %24 : vector<1x8xf32> to vector<8x8xf32>
    %26 = arith.mulf %1, %25 : vector<8x8xf32>
    %cst_17 = arith.constant dense<0.000000e+00> : vector<8xf32>
    %27 = vector.multi_reduction <add>, %26, %cst_17 [1] : vector<8x8xf32> to vector<8xf32>
    %28 = vector.shape_cast %27 : vector<8xf32> to vector<8x1xf32>
    %29 = arith.addf %23, %28 : vector<8x1xf32>
    %30 = tpu.concatenate %18, %29 in 1 : vector<8x1xf32>, vector<8x1xf32> -> vector<8x2xf32>
    %31 = vector.broadcast %5 : vector<1x2xf32> to vector<8x2xf32>
    %32 = arith.addf %30, %31 : vector<8x2xf32>
    %33 = arith.negf %32 : vector<8x2xf32>
    %34 = math.exp %33 : vector<8x2xf32>
    %cst_18 = arith.constant 1.000000e+00 : f32
    %35 = vector.broadcast %cst_18 : f32 to vector<8x2xf32>
    %36 = arith.addf %35, %34 : vector<8x2xf32>
    %37 = arith.divf %35, %36 : vector<8x2xf32>
    %38 = math.tanh %32 : vector<8x2xf32>
    %39 = arith.addf %2, %38 : vector<8x2xf32>
    %40 = arith.mulf %39, %37 : vector<8x2xf32>
    %41 = math.tanh %40 : vector<8x2xf32>
    %42 = arith.mulf %41, %37 : vector<8x2xf32>
    %43 = vector.broadcast %6 : vector<1x2xf32> to vector<8x2xf32>
    %44 = arith.mulf %42, %43 : vector<8x2xf32>
    %cst_19 = arith.constant dense<0.000000e+00> : vector<8xf32>
    %45 = vector.multi_reduction <add>, %44, %cst_19 [1] : vector<8x2xf32> to vector<8xf32>
    %46 = vector.shape_cast %45 : vector<8xf32> to vector<8x1xf32>
    %47 = vector.broadcast %7 : vector<1x1xf32> to vector<8x1xf32>
    %48 = arith.addf %46, %47 : vector<8x1xf32>
    %49 = arith.negf %48 : vector<8x1xf32>
    %50 = math.exp %49 : vector<8x1xf32>
    %cst_20 = arith.constant 1.000000e+00 : f32
    %51 = vector.broadcast %cst_20 : f32 to vector<8x1xf32>
    %52 = arith.addf %51, %50 : vector<8x1xf32>
    %53 = arith.divf %51, %52 : vector<8x1xf32>
    %cst_21 = arith.constant 0.000000e+00 : f32
    %54 = vector.broadcast %cst_21 : f32 to vector<8x123xf32>
    %55 = tpu.concatenate %53, %42, %40, %54 in 1 : vector<8x1xf32>, vector<8x2xf32>, vector<8x2xf32>, vector<8x123xf32> -> vector<8x128xf32>
    %c0_22 = arith.constant 0 : index
    %c0_23 = arith.constant 0 : index
    %56 = vector.load %arg8[%c0_22, %c0_23] : memref<8x128xf32, #tpu.memory_space<vmem>>, vector<8x128xf32>
    tpu.vector_store %arg8[%c0_22, %c0_23], %55 {strides = array<i32>} : memref<8x128xf32, #tpu.memory_space<vmem>>, vector<8x128xf32>,
    return
  }
}

</mosaic_0001>

<llo_original>
// kernel: lstm_forward.1
$region0: #{lstm_forward.1}
  #allocation0 [shape = 'u32[]', space=smem, size = 0x4, offset = 0x4, fixed_abs, tag = 'smem constant byte address 0x4 - core index']
  #allocation1 [shape = 'u32[144,128]{1,0:T(1,128)}', space=vmem, size = 0x12000, scoped, tag = 'internal scratch']
  #allocation2 [shape = 'f32[1,1]{1,0:T(1,128)S(1)}', space=vmem, size = 0x200, scoped, tag = 'scoped memory for lstm_forward.1']
  %s0 = inlined_call_operand.vmem [shape: f32[8,4], index: 0, kind: input, shape index: {}]
  %s1 = inlined_call_operand.vmem [shape: f32[8,8], index: 1, kind: input, shape index: {}]
  %s2 = inlined_call_operand.vmem [shape: f32[8,2], index: 2, kind: input, shape index: {}]
  %s3 = inlined_call_operand.vmem [shape: f32[2,4], index: 3, kind: input, shape index: {}]
  %s4 = inlined_call_operand.vmem [shape: f32[2,8], index: 4, kind: input, shape index: {}]
  %s5 = inlined_call_operand.vmem [shape: f32[1,2], index: 5, kind: input, shape index: {}]
  %s6 = inlined_call_operand.vmem [shape: f32[1,2], index: 6, kind: input, shape index: {}]
  %s7 = inlined_call_operand.<no memory space> [shape: f32[1,1], index: 7, kind: input, shape index: {}]
  %s8 = inlined_call_operand.vmem [shape: f32[8,128], index: 8, kind: output, shape index: {}]
  %s9 = sld [smem:[#allocation0]]
  $region42: #{lstm_forward.1} parent=0
    _
  %s11 = ssub.s32 1, %s9
  %s12 = scalar_select 0, %s11, %s9
  %v13 = vstv %s7
  %14 = vst [vmem:[#allocation2] sm:$0x1] %v13
  // Predicated region
  $region2: #{lstm_forward.1} parent=0 // pred_check
    _
  $region3: #{lstm_forward.1} parent=0 // pred_check_branch
    %16 = sbr.rel (0) target = $region5
  $region4: #{lstm_forward.1} parent=0 // pred_region
    _
  $region5: #{lstm_forward.1} parent=0 // pred_fallthru
    _
  // Predicated region
  $region6: #{lstm_forward.1} parent=0 // pred_check
    _
  $region7: #{lstm_forward.1} parent=0 // pred_check_branch
    %18 = sbr.rel (0) target = $region9
  $region8: #{lstm_forward.1} parent=0 // pred_region
    _
  $region9: #{lstm_forward.1} parent=0 // pred_fallthru
    _
  // Predicated region
  $region10: #{lstm_forward.1} parent=0 // pred_check
    _
  $region11: #{lstm_forward.1} parent=0 // pred_check_branch
    %20 = sbr.rel (0) target = $region13
  $region12: #{lstm_forward.1} parent=0 // pred_region
    _
  $region13: #{lstm_forward.1} parent=0 // pred_fallthru
    _
  // Predicated region
  $region14: #{lstm_forward.1} parent=0 // pred_check
    _
  $region15: #{lstm_forward.1} parent=0 // pred_check_branch
    %22 = sbr.rel (0) target = $region17
  $region16: #{lstm_forward.1} parent=0 // pred_region
    _
  $region17: #{lstm_forward.1} parent=0 // pred_fallthru
    _
  // Predicated region
  $region18: #{lstm_forward.1} parent=0 // pred_check
    _
  $region19: #{lstm_forward.1} parent=0 // pred_check_branch
    %24 = sbr.rel (0) target = $region21
  $region20: #{lstm_forward.1} parent=0 // pred_region
    _
  $region21: #{lstm_forward.1} parent=0 // pred_fallthru
    _
  // Predicated region
  $region22: #{lstm_forward.1} parent=0 // pred_check
    _
  $region23: #{lstm_forward.1} parent=0 // pred_check_branch
    %26 = sbr.rel (0) target = $region25
  $region24: #{lstm_forward.1} parent=0 // pred_region
    _
  $region25: #{lstm_forward.1} parent=0 // pred_fallthru
    _
  // Predicated region
  $region26: #{lstm_forward.1} parent=0 // pred_check
    _
  $region27: #{lstm_forward.1} parent=0 // pred_check_branch
    %28 = sbr.rel (0) target = $region29
  $region28: #{lstm_forward.1} parent=0 // pred_region
    _
  $region29: #{lstm_forward.1} parent=0 // pred_fallthru
    _
  // Predicated region
  $region30: #{lstm_forward.1} parent=0 // pred_check
    _
  $region31: #{lstm_forward.1} parent=0 // pred_check_branch
    %30 = sbr.rel (0) target = $region33
  $region32: #{lstm_forward.1} parent=0 // pred_region
    _
  $region33: #{lstm_forward.1} parent=0 // pred_fallthru
    _
  %v31 = vld [vmem:[%s0] sm:$0xff]
  %v32 = vld [vmem:[%s1] sm:$0xff]
  %v33 = vld [vmem:[%s2] sm:$0xff]
  %v34 = vld [vmem:[%s3] sm:$0x3]
  %v35 = vld [vmem:[%s4] sm:$0x3]
  %v36 = vld [vmem:[%s5] sm:$0x1]
  %v37 = vld [vmem:[%s6] sm:$0x1]
  %v38 = vld [vmem:[#allocation2] sm:$0x1]
  %v39 = vlaneseq
  %v40 = vshrl.u32 %v39, 7
  %v41 = vsub.s32 0, %v40
  %v42 = vrot.slane %v34, %v41
  %v43 = vmul.f32 %v31, %v42
  %vm44 = vcmask 31744
  %v45 = vsel %vm44, %v43, 0.0
  %46 = vadd.xlane.f32.xlu0 %v45
  %v47 = vpop.xlane.xlu0 %46
  %v48 = vlaneseq
  %v49 = vshrl.u32 %v48, 7
  %v50 = vsub.s32 0, %v49
  %v51 = vrot.slane %v35, %v50
  %v52 = vmul.f32 %v32, %v51
  %vm53 = vcmask 64512
  %v54 = vsel %vm53, %v52, 0.0
  %55 = vadd.xlane.f32.xlu0 %v54
  %v56 = vpop.xlane.xlu0 %55
  %v57 = vadd.f32 %v47, %v56
  %v58 = vlaneseq
  %v59 = vshrl.u32 %v58, 7
  %v60 = vsub.s32 1, %v59
  %v61 = vrot.slane %v34, %v60
  %v62 = vmul.f32 %v31, %v61
  %v63 = vsel %vm44, %v62, 0.0
  %64 = vadd.xlane.f32.xlu0 %v63
  %v65 = vpop.xlane.xlu0 %64
  %v66 = vlaneseq
  %v67 = vshrl.u32 %v66, 7
  %v68 = vsub.s32 1, %v67
  %v69 = vrot.slane %v35, %v68
  %v70 = vmul.f32 %v32, %v69
  %v71 = vsel %vm53, %v70, 0.0
  %72 = vadd.xlane.f32.xlu0 %v71
  %v73 = vpop.xlane.xlu0 %72
  %v74 = vadd.f32 %v65, %v73
  %vm75 = vcmask 7168
  %v76 = vsel %vm75, %v57, %v74
  %v78 = vlaneseq
  %v79 = vshrl.u32 %v78, 7
  %v80 = vsub.s32 0, %v79
  %v81 = vrot.slane %v36, %v80
  %v83 = vadd.f32 %v76, %v81
  %v84 = vxor.u32 %v83, 2147483648
  %v85 = vmul.f32 %v84, 1.442695
  %v86 = vpow.pop %v85
  %v87 = vadd.f32 %v86, 1.0
  %v88 = vrcp.pop %v87
  %v89 = vmul.f32 1.0, %v88
  %v90 = vtanh.pop %v83
  %v91 = vadd.f32 %v33, %v90
  %v92 = vmul.f32 %v91, %v89
  %v93 = vtanh.pop %v92
  %v94 = vmul.f32 %v93, %v89
  %v96 = vlaneseq
  %v97 = vshrl.u32 %v96, 7
  %v98 = vsub.s32 0, %v97
  %v99 = vrot.slane %v37, %v98
  %v101 = vmul.f32 %v94, %v99
  %vm102 = vcmask 15360
  %v103 = vsel %vm102, %v101, 0.0
  %104 = vadd.xlane.f32.xlu0 %v103
  %v105 = vpop.xlane.xlu0 %104
  %v107 = vlaneseq
  %v108 = vshrl.u32 %v107, 7
  %v109 = vsub.s32 0, %v108
  %v110 = vrot.slane %v38, %v109
  %v112 = vadd.f32 %v105, %v110
  %v113 = vxor.u32 %v112, 2147483648
  %v114 = vmul.f32 %v113, 1.442695
  %v115 = vpow.pop %v114
  %v116 = vadd.f32 %v115, 1.0
  %v117 = vrcp.pop %v116
  %v118 = vmul.f32 1.0, %v117
  %120 = vrot.lane.b32.xlu0 %v94, 1
  %v121 = vpop.permute.xlu0 %120
  %124 = vrot.lane.b32.xlu0 %v92, 3
  %v125 = vpop.permute.xlu0 %124
  %v127 = vsel %vm75, %v118, %v121
  %vm128 = vcmask 23552
  %v129 = vsel %vm128, %v127, %v125
  %vm130 = vcmask 39936
  %v131 = vsel %vm130, %v129, 0.0
  %132 = vst [vmem:[%s8] sm:$0xff] %v131
  // Predicated region
  $region34: #{lstm_forward.1} parent=0 // pred_check
    _
  $region35: #{lstm_forward.1} parent=0 // pred_check_branch
    %134 = sbr.rel (0) target = $region37
  $region36: #{lstm_forward.1} parent=0 // pred_region
    _
  $region37: #{lstm_forward.1} parent=0 // pred_fallthru
    _
  // Predicated region
  $region38: #{lstm_forward.1} parent=0 // pred_check
    _
  $region39: #{lstm_forward.1} parent=0 // pred_check_branch
    %136 = sbr.rel (0) target = $region41
  $region40: #{lstm_forward.1} parent=0 // pred_region
    _
  $region41: #{lstm_forward.1} parent=0 // pred_fallthru
    _

</llo_original>
